<compile_context>
chip_gen: v5e
topology: v5e:2x2
jax: 0.10.0
libtpu: 0.0.40
codegen_flags: <defaults>
</compile_context>

<pallas_src>
import jax
import jax.numpy as jnp
from jax.experimental import pallas as pl
from jax.experimental.pallas import tpu as pltpu

HIDDEN = 64


def gate_kernel(x_ref, w1_ref, w2_ref, misc_ref, o_ref):
    # x_ref   : [TILE_N, F]   bf16   (batch tile)
    # w1_ref  : [F, 64]       bf16   (bias + BN1 folded in)
    # w2_ref  : [64, 64]      bf16   (bias + BN2 folded in)
    # misc_ref: [4, 64]       f32    row0=b1', row1=b2', row2=w3 row, row3[0]=b3
    # o_ref   : [TILE_N, 1]   f32
    x = x_ref[...]
    misc = misc_ref[...]
    b1 = misc[0:1, :]        # [1, 64]
    b2 = misc[1:2, :]        # [1, 64]
    w3_row = misc[2:3, :]    # [1, 64]
    b3 = misc[3:4, 0:1]      # [1, 1]

    # ----- linear1 (+ folded BN1) + ReLU ----- (dropout1: identity at inference)
    h = jnp.dot(x, w1_ref[...], preferred_element_type=jnp.float32) + b1
    h = jnp.maximum(h, 0.0)

    # ----- linear2 (+ folded BN2) + ReLU ----- (dropout2: identity at inference)
    h = jnp.dot(h.astype(jnp.bfloat16), w2_ref[...],
                preferred_element_type=jnp.float32) + b2
    h = jnp.maximum(h, 0.0)

    # ----- linear3 (64 -> 1) as a lane reduction + sigmoid -----
    z = jnp.sum(h * w3_row, axis=-1, keepdims=True) + b3
    o_ref[...] = jax.nn.sigmoid(z)


def fold_params(params):
    """Fold Linear bias + eval-mode BatchNorm1d scale/shift into the weights."""
    w1f = params["w1"] * params["s1"]                       # [F, 64]
    b1f = params["b1"] * params["s1"] + params["t1"]        # [1, 64]
    w2f = params["w2"] * params["s2"]                       # [64, 64]
    b2f = params["b2"] * params["s2"] + params["t2"]        # [1, 64]
    w3_row = params["w3"].reshape(1, HIDDEN)                # [64, 1] -> [1, 64]
    b3 = params["b3"].reshape(1, 1)

    misc = jnp.zeros((4, HIDDEN), jnp.float32)
    misc = misc.at[0:1, :].set(b1f)
    misc = misc.at[1:2, :].set(b2f)
    misc = misc.at[2:3, :].set(w3_row)
    misc = misc.at[3, 0].set(b3[0, 0])
    return w1f.astype(jnp.bfloat16), w2f.astype(jnp.bfloat16), misc


def gate_forward(x, params, *, tile_n=256):
    """x: [N, F] float32. params: dict of weights + BN scale/shift (see init_params)."""
    N, F = x.shape
    w1f, w2f, misc = fold_params(params)

    # Batch tile: multiple of 8 sublanes, capped at N; pad N up to a tile multiple.
    tn = min(tile_n, N)
    tn = max(8, (tn // 8) * 8)
    n_pad = pl.cdiv(N, tn) * tn

    x_b = x.astype(jnp.bfloat16)
    if n_pad != N:
        x_b = jnp.pad(x_b, ((0, n_pad - N), (0, 0)))

    out = pl.pallas_call(
        gate_kernel,
        out_shape=jax.ShapeDtypeStruct((n_pad, 1), jnp.float32),
        grid=(n_pad // tn,),
        in_specs=[
            pl.BlockSpec((tn, F), lambda i: (i, 0)),            # x batch tile
            pl.BlockSpec((F, HIDDEN), lambda i: (0, 0)),        # folded W1 (resident)
            pl.BlockSpec((HIDDEN, HIDDEN), lambda i: (0, 0)),   # folded W2 (resident)
            pl.BlockSpec((4, HIDDEN), lambda i: (0, 0)),        # packed biases / w3 / b3
        ],
        out_specs=pl.BlockSpec((tn, 1), lambda i: (i, 0)),
        compiler_params=pltpu.CompilerParams(
            dimension_semantics=("parallel",)),
    )(x_b, w1f, w2f, misc)
    return out[:N]


def init_params(key, n_his):
    """Deterministic init mimicking PyTorch defaults (U(-1/sqrt(fan_in), +1/sqrt(fan_in)))."""
    f_in = n_his + 1
    ks = jax.random.split(key, 6)

    def lin(kw, kb, fan_in, fan_out):
        bound = 1.0 / jnp.sqrt(fan_in)
        w = jax.random.uniform(kw, (fan_in, fan_out), jnp.float32, -bound, bound)
        b = jax.random.uniform(kb, (1, fan_out), jnp.float32, -bound, bound)
        return w, b

    w1, b1 = lin(ks[0], ks[1], f_in, HIDDEN)
    w2, b2 = lin(ks[2], ks[3], HIDDEN, HIDDEN)
    w3, b3 = lin(ks[4], ks[5], HIDDEN, 1)

    # BatchNorm1d defaults: gamma=1, beta=0, running_mean=0, running_var=1, eps=1e-5.
    eps = 1e-5
    gamma = jnp.ones((1, HIDDEN), jnp.float32)
    beta = jnp.zeros((1, HIDDEN), jnp.float32)
    rmean = jnp.zeros((1, HIDDEN), jnp.float32)
    rvar = jnp.ones((1, HIDDEN), jnp.float32)
    scale = gamma / jnp.sqrt(rvar + eps)
    shift = beta - rmean * scale

    return {
        "w1": w1, "b1": b1, "s1": scale, "t1": shift,
        "w2": w2, "b2": b2, "s2": scale, "t2": shift,
        "w3": w3, "b3": b3,
    }


def reference_forward(x, p):
    """Plain-JAX f32 reference of the original (unfolded) module in eval mode."""
    h = x @ p["w1"] + p["b1"]
    h = jnp.maximum(h * p["s1"] + p["t1"], 0.0)
    h = h @ p["w2"] + p["b2"]
    h = jnp.maximum(h * p["s2"] + p["t2"], 0.0)
    z = h @ p["w3"] + p["b3"]
    return jax.nn.sigmoid(z)


if __name__ == "__main__":
    n_his = 7          # input feature dim = n_his + 1 = 8
    batch = 16

    key = jax.random.PRNGKey(0)
    k_x, k_p = jax.random.split(key)
    x = jax.random.normal(k_x, (batch, n_his + 1), jnp.float32)
    params = init_params(k_p, n_his)

    out = gate_forward(x, params)
    out = jax.block_until_ready(out)

    ref = reference_forward(x, params)
    assert out.shape == (batch, 1)
    # Kernel uses bf16 matmul operands (f32 accumulate); sigmoid output differs
    # from the pure-f32 reference only at the ~1e-3 level.
    assert jnp.allclose(out, ref, atol=2e-2, rtol=0.0), "mismatch vs JAX reference"

    print("KERNEL_OK")
</pallas_src>

<mosaic_0001>
module attributes {stable_mosaic.version = 11 : i64} {
  func.func @gate_kernel(%arg0: i32, %arg1: memref<16x8xbf16, #tpu.memory_space<vmem>>, %arg2: memref<8x64xbf16, #tpu.memory_space<vmem>>, %arg3: memref<64x64xbf16, #tpu.memory_space<vmem>>, %arg4: memref<4x64xf32, #tpu.memory_space<vmem>>, %arg5: memref<16x1xf32, #tpu.memory_space<vmem>>) attributes {dimension_semantics = [#tpu.dimension_semantics<parallel>], iteration_bounds = array<i64: 1>, scalar_prefetch = 0 : i64, scratch_operands = 0 : i64, tpu.core_type = #tpu.core_type<tc>, window_params = [{transform_indices = @transform_0, window_bounds = array<i64: 16, 8>}, {pipeline_mode = #tpu.pipeline_mode<synchronous>, transform_indices = @transform_1, window_bounds = array<i64: 8, 64>}, {pipeline_mode = #tpu.pipeline_mode<synchronous>, transform_indices = @transform_2, window_bounds = array<i64: 64, 64>}, {pipeline_mode = #tpu.pipeline_mode<synchronous>, transform_indices = @transform_3, window_bounds = array<i64: 4, 64>}, {transform_indices = @transform_4, window_bounds = array<i64: 16, 1>}]} {
    %c0 = arith.constant 0 : index
    %c0_0 = arith.constant 0 : index
    %0 = vector.load %arg1[%c0, %c0_0] : memref<16x8xbf16, #tpu.memory_space<vmem>>, vector<16x8xbf16>
    %c0_1 = arith.constant 0 : index
    %c0_2 = arith.constant 0 : index
    %1 = vector.load %arg4[%c0_1, %c0_2] : memref<4x64xf32, #tpu.memory_space<vmem>>, vector<4x64xf32>
    %2 = vector.extract_strided_slice %1 {offsets = [0, 0], sizes = [1, 64], strides = [1, 1]} : vector<4x64xf32> to vector<1x64xf32>
    %3 = vector.extract_strided_slice %1 {offsets = [1, 0], sizes = [1, 64], strides = [1, 1]} : vector<4x64xf32> to vector<1x64xf32>
    %4 = vector.extract_strided_slice %1 {offsets = [2, 0], sizes = [1, 64], strides = [1, 1]} : vector<4x64xf32> to vector<1x64xf32>
    %5 = vector.extract_strided_slice %1 {offsets = [3, 0], sizes = [1, 1], strides = [1, 1]} : vector<4x64xf32> to vector<1x1xf32>
    %c0_3 = arith.constant 0 : index
    %c0_4 = arith.constant 0 : index
    %6 = vector.load %arg2[%c0_3, %c0_4] : memref<8x64xbf16, #tpu.memory_space<vmem>>, vector<8x64xbf16>
    %cst = arith.constant dense<0.000000e+00> : vector<16x64xf32>
    %7 = tpu.matmul %0, %6, %cst {dimension_numbers = #tpu.dot_dimension_numbers<[1], [0], [0], [1], [0, 0, 1, 1], [], []>} : vector<16x8xbf16>, vector<8x64xbf16>, vector<16x64xf32> -> vector<16x64xf32>
    %8 = vector.broadcast %2 : vector<1x64xf32> to vector<16x64xf32>
    %9 = arith.addf %7, %8 : vector<16x64xf32>
    %cst_5 = arith.constant 0.000000e+00 : f32
    %10 = vector.broadcast %cst_5 : f32 to vector<16x64xf32>
    %11 = arith.maximumf %9, %10 : vector<16x64xf32>
    %12 = arith.truncf %11 : vector<16x64xf32> to vector<16x64xbf16>
    %c0_6 = arith.constant 0 : index
    %c0_7 = arith.constant 0 : index
    %13 = vector.load %arg3[%c0_6, %c0_7] : memref<64x64xbf16, #tpu.memory_space<vmem>>, vector<64x64xbf16>
    %cst_8 = arith.constant dense<0.000000e+00> : vector<16x64xf32>
    %14 = tpu.matmul %12, %13, %cst_8 {dimension_numbers = #tpu.dot_dimension_numbers<[1], [0], [0], [1], [0, 0, 1, 1], [], []>} : vector<16x64xbf16>, vector<64x64xbf16>, vector<16x64xf32> -> vector<16x64xf32>
    %15 = vector.broadcast %3 : vector<1x64xf32> to vector<16x64xf32>
    %16 = arith.addf %14, %15 : vector<16x64xf32>
    %cst_9 = arith.constant 0.000000e+00 : f32
    %17 = vector.broadcast %cst_9 : f32 to vector<16x64xf32>
    %18 = arith.maximumf %16, %17 : vector<16x64xf32>
    %19 = vector.broadcast %4 : vector<1x64xf32> to vector<16x64xf32>
    %20 = arith.mulf %18, %19 : vector<16x64xf32>
    %cst_10 = arith.constant dense<0.000000e+00> : vector<16xf32>
    %21 = vector.multi_reduction <add>, %20, %cst_10 [1] : vector<16x64xf32> to vector<16xf32>
    %22 = vector.shape_cast %21 : vector<16xf32> to vector<16x1xf32>
    %23 = vector.broadcast %5 : vector<1x1xf32> to vector<16x1xf32>
    %24 = arith.addf %22, %23 : vector<16x1xf32>
    %25 = arith.negf %24 : vector<16x1xf32>
    %26 = math.exp %25 : vector<16x1xf32>
    %cst_11 = arith.constant 1.000000e+00 : f32
    %27 = vector.broadcast %cst_11 : f32 to vector<16x1xf32>
    %28 = arith.addf %27, %26 : vector<16x1xf32>
    %29 = arith.divf %27, %28 : vector<16x1xf32>
    %c0_12 = arith.constant 0 : index
    %c0_13 = arith.constant 0 : index
    %30 = vector.load %arg5[%c0_12, %c0_13] : memref<16x1xf32, #tpu.memory_space<vmem>>, vector<16x1xf32>
    tpu.vector_store %arg5[%c0_12, %c0_13], %29 {strides = array<i32>} : memref<16x1xf32, #tpu.memory_space<vmem>>, vector<16x1xf32>,
    return
  }
  func.func @transform_0(%arg0: i32) -> (i32, i32) {
    %c0_i32 = arith.constant 0 : i32
    %c0_i32_0 = arith.constant 0 : i32
    return %arg0, %c0_i32 : i32, i32
  }
  func.func @transform_1(%arg0: i32) -> (i32, i32) {
    %c0_i32 = arith.constant 0 : i32
    %c0_i32_0 = arith.constant 0 : i32
    %c0_i32_1 = arith.constant 0 : i32
    return %c0_i32, %c0_i32_0 : i32, i32
  }
  func.func @transform_2(%arg0: i32) -> (i32, i32) {
    %c0_i32 = arith.constant 0 : i32
    %c0_i32_0 = arith.constant 0 : i32
    %c0_i32_1 = arith.constant 0 : i32
    return %c0_i32, %c0_i32_0 : i32, i32
  }
  func.func @transform_3(%arg0: i32) -> (i32, i32) {
    %c0_i32 = arith.constant 0 : i32
    %c0_i32_0 = arith.constant 0 : i32
    %c0_i32_1 = arith.constant 0 : i32
    return %c0_i32, %c0_i32_0 : i32, i32
  }
  func.func @transform_4(%arg0: i32) -> (i32, i32) {
    %c0_i32 = arith.constant 0 : i32
    %c0_i32_0 = arith.constant 0 : i32
    return %arg0, %c0_i32 : i32, i32
  }
}

</mosaic_0001>

<llo_original>
// kernel: tpu_custom_call.1
$region0: #{tpu_custom_call.1}
  #allocation0 [shape = 'u32[]', space=smem, size = 0x4, offset = 0x4, fixed_abs, tag = 'smem constant byte address 0x4 - core index']
  #allocation1 [shape = 'u32[72,128]{1,0:T(1,128)}', space=vmem, size = 0x9000, scoped, tag = 'internal scratch']
  %s0 = inlined_call_operand.vmem [shape: bf16[16,8], index: 0, kind: input, shape index: {}]
  %s1 = inlined_call_operand.vmem [shape: bf16[8,64], index: 1, kind: input, shape index: {}]
  %s2 = inlined_call_operand.hbm [shape: bf16[64,64], index: 2, kind: input, shape index: {}]
  %s3 = inlined_call_operand.vmem [shape: f32[4,64], index: 3, kind: input, shape index: {}]
  %s4 = inlined_call_operand.vmem [shape: f32[16,1], index: 4, kind: output, shape index: {}]
  %s5 = sld [smem:[#allocation0]]
  $region30: #{tpu_custom_call.1} parent=0
    _
  %s7 = ssub.s32 1, %s5
  %s8 = scalar_select 0, %s7, %s5
  $region1: #{tpu_custom_call.1} parent=0
    #allocation2 [shape = 'u8[16384]{0}', space=vmem, size = 0x4000, scoped, tag = 'input window, operand 2, single buffered']
    #allocation3 [shape = 's32[1]{0}', space=sflag, size = 0x4, scoped, tag = 'scoped memory for tpu_custom_call.1']
    %9 = vsyncpa [#allocation3], 0
    // Predicated region
    $region2: #{tpu_custom_call.1} parent=1 // pred_check
      _
    $region3: #{tpu_custom_call.1} parent=1 // pred_check_branch
      %11 = sbr.rel (0) target = $region5
    $region4: #{tpu_custom_call.1} parent=1 // pred_region
      _
    $region5: #{tpu_custom_call.1} parent=1 // pred_fallthru
      _
    // Predicated region
    $region6: #{tpu_custom_call.1} parent=1 // pred_check
      _
    $region7: #{tpu_custom_call.1} parent=1 // pred_check_branch
      %13 = sbr.rel (0) target = $region9
    $region8: #{tpu_custom_call.1} parent=1 // pred_region
      _
    $region9: #{tpu_custom_call.1} parent=1 // pred_fallthru
      _
    // Predicated region
    $region10: #{tpu_custom_call.1} parent=1 // pred_check
      _
    $region11: #{tpu_custom_call.1} parent=1 // pred_check_branch
      %15 = sbr.rel (0) target = $region13
    $region12: #{tpu_custom_call.1} parent=1 // pred_region
      %17 = vsyncadd [#allocation3], 0
      %s18 = sshll.u32 %s2, 4
      %s19 = int_to_ptr.hbm [resolvable:$true] %s18
      %s20 = sshll.u32 [#allocation2], 4
      %s21 = int_to_ptr.vmem [resolvable:$true] %s20
      %26 = dma.hbm_to_vmem [thread:$0]  %s19, 512, %s21, [#allocation3], 64, 64, 4
    $region13: #{tpu_custom_call.1} parent=1 // pred_fallthru
      _
    // Predicated region
    $region14: #{tpu_custom_call.1} parent=1 // pred_check
      _
    $region15: #{tpu_custom_call.1} parent=1 // pred_check_branch
      %28 = sbr.rel (0) target = $region17
    $region16: #{tpu_custom_call.1} parent=1 // pred_region
      _
    $region17: #{tpu_custom_call.1} parent=1 // pred_fallthru
      _
    // Predicated region
    $region18: #{tpu_custom_call.1} parent=1 // pred_check
      _
    $region19: #{tpu_custom_call.1} parent=1 // pred_check_branch
      %30 = sbr.rel (0) target = $region21
    $region20: #{tpu_custom_call.1} parent=1 // pred_region
      %32 = dma.done [#allocation3], 512
    $region21: #{tpu_custom_call.1} parent=1 // pred_fallthru
      _
    %v34 = vld [vmem:[%s0] sm:$0xf]
    %v35 = vld [vmem:[%s0 + $0x4] sm:$0xf]
    %v36 = vld [vmem:[%s3] sm:$0xf]
    %v37 = vld [vmem:[%s1] sm:$0xf]
    %v38 = vperm.slane %v36, 0
    %v41 = vunpack.c.l.b16 %v34
    %v42 = vunpack.c.l.b16 %v35
    %v43 = vpack.c.b16 %v42, %v41
    %vm44 = vcmask 64512
    %v46 = vsel %vm44, %v43, 0
    %vm48 = vcmask 1043456
    %v50 = vsel %vm48, %v37, 0
    %52 = vmatpush.bf16.msra.mxu0 0
    %53 = vmatpush.bf16.msra.mxu0 0
    %54 = vmatpush.bf16.msra.mxu0 0
    %55 = vmatpush.bf16.msra.mxu0 0
    %56 = vmatpush.bf16.msra.mxu0 0
    %57 = vmatpush.bf16.msra.mxu0 0
    %58 = vmatpush.bf16.msra.mxu0 0
    %59 = vmatpush.bf16.msra.mxu0 %v50
    %60 = vmatmul.bf16.gmra.mxu0 %v46
    %v61 = vpop.f32.mrf.mxu0
    %v62 = vadd.f32 %v38, %v61
    %v63 = vpop.f32.mrf.mxu0
    %v64 = vadd.f32 %v38, %v63
    %65 = vdwg.mxu0
    %v66 = vmax.f32 %v62, 0.0
    %v67 = vmax.f32 %v64, 0.0
    %v68 = vpack.c.bf16 %v67, %v66
    %v69 = vld [vmem:[#allocation2] sm:$0xf]
    %v70 = vld [vmem:[#allocation2 + $0x4] sm:$0xf]
    %v71 = vld [vmem:[#allocation2 + $0x8] sm:$0xf]
    %v72 = vld [vmem:[#allocation2 + $0xc] sm:$0xf]
    %v73 = vld [vmem:[#allocation2 + $0x10] sm:$0xf]
    %v74 = vld [vmem:[#allocation2 + $0x14] sm:$0xf]
    %v75 = vld [vmem:[#allocation2 + $0x18] sm:$0xf]
    %v76 = vld [vmem:[#allocation2 + $0x1c] sm:$0xf]
    %v77 = vperm.slane %v36, 1
    %v86 = vunpack.c.l.b16 %v69
    %v87 = vunpack.c.l.b16 %v70
    %v88 = vunpack.c.l.b16 %v71
    %v89 = vunpack.c.l.b16 %v72
    %v90 = vunpack.c.l.b16 %v73
    %v91 = vunpack.c.l.b16 %v74
    %v92 = vunpack.c.l.b16 %v75
    %v93 = vunpack.c.l.b16 %v76
    %v94 = vpack.c.b16 %v87, %v86
    %v95 = vpack.c.b16 %v89, %v88
    %v96 = vpack.c.b16 %v91, %v90
    %v97 = vpack.c.b16 %v93, %v92
    %vm102 = vcmask 523264
    %v104 = vsel %vm102, %v68, 0
    %106 = vmatpush.bf16.msra.mxu0 0
    %107 = vmatpush.bf16.msra.mxu0 0
    %108 = vmatpush.bf16.msra.mxu0 0
    %109 = vmatpush.bf16.msra.mxu0 0
    %110 = vmatpush.bf16.msra.mxu0 %v97
    %111 = vmatpush.bf16.msra.mxu0 %v96
    %112 = vmatpush.bf16.msra.mxu0 %v95
    %113 = vmatpush.bf16.msra.mxu0 %v94
    %114 = vmatmul.bf16.gmra.mxu0 %v104
    %v115 = vpop.f32.mrf.mxu0
    %v116 = vadd.f32 %v77, %v115
    %v117 = vpop.f32.mrf.mxu0
    %v118 = vadd.f32 %v77, %v117
    %119 = vdwg.mxu0
    %v120 = vmax.f32 %v116, 0.0
    %v121 = vmax.f32 %v118, 0.0
    %v122 = vperm.slane %v36, 2
    %v123 = vmul.f32 %v120, %v122
    %v124 = vmul.f32 %v121, %v122
    %v125 = vsel %vm102, %v123, 0.0
    %126 = vadd.xlane.f32.xlu0 %v125
    %v127 = vpop.xlane.xlu0 %126
    %v128 = vsel %vm102, %v124, 0.0
    %129 = vadd.xlane.f32.xlu0 %v128
    %v130 = vpop.xlane.xlu0 %129
    %v131 = vperm.slane %v36, 3
    %v132 = vadd.f32 %v127, %v131
    %v133 = vadd.f32 %v130, %v131
    %v134 = vxor.u32 %v132, 2147483648
    %v135 = vxor.u32 %v133, 2147483648
    %v136 = vmul.f32 %v134, 1.442695
    %v137 = vpow.pop %v136
    %v138 = vmul.f32 %v135, 1.442695
    %v139 = vpow.pop %v138
    %v140 = vadd.f32 %v137, 1.0
    %v141 = vadd.f32 %v139, 1.0
    %v142 = vrcp.pop %v140
    %v143 = vmul.f32 %v140, %v142
    %v144 = vsub.f32 1.0, %v143
    %v145 = vmul.f32 %v142, %v144
    %v146 = vadd.f32 %v142, %v145
    %vm147 = vweird.f32 %v140
    %vm148 = vweird.f32 %v142
    %vm149 = vmor %vm147, %vm148
    %v150 = vsel %vm149, %v142, %v146
    %v151 = vand.u32 2147483647, %v140
    %vm152 = vcmp.eq.f32.partialorder %v151, 8.507059e+37
    %v153 = vand.u32 %v140, 2147483648
    %v154 = vor.u32 1.1754944e-38, %v153
    %v155 = vsel %vm152, %v154, %v150
    %v156 = vmul.f32 1.0, %v155
    %v157 = vrcp.pop %v141
    %v158 = vmul.f32 %v141, %v157
    %v159 = vsub.f32 1.0, %v158
    %v160 = vmul.f32 %v157, %v159
    %v161 = vadd.f32 %v157, %v160
    %vm162 = vweird.f32 %v141
    %vm163 = vweird.f32 %v157
    %vm164 = vmor %vm162, %vm163
    %v165 = vsel %vm164, %v157, %v161
    %v166 = vand.u32 2147483647, %v141
    %vm167 = vcmp.eq.f32.partialorder %v166, 8.507059e+37
    %v168 = vand.u32 %v141, 2147483648
    %v169 = vor.u32 1.1754944e-38, %v168
    %v170 = vsel %vm167, %v169, %v165
    %v171 = vmul.f32 1.0, %v170
    %vm172 = vcmask 7168
    %173 = vst.msk [vmem:[%s4] sm:$0xff] %vm172, %v156
    %174 = vst.msk [vmem:[%s4 + $0x8] sm:$0xff] %vm172, %v171
    // Predicated region
    $region22: #{tpu_custom_call.1} parent=1 // pred_check
      _
    $region23: #{tpu_custom_call.1} parent=1 // pred_check_branch
      %176 = sbr.rel (0) target = $region25
    $region24: #{tpu_custom_call.1} parent=1 // pred_region
      _
    $region25: #{tpu_custom_call.1} parent=1 // pred_fallthru
      _
    // Predicated region
    $region26: #{tpu_custom_call.1} parent=1 // pred_check
      _
    $region27: #{tpu_custom_call.1} parent=1 // pred_check_branch
      %178 = sbr.rel (0) target = $region29
    $region28: #{tpu_custom_call.1} parent=1 // pred_region
      _
    $region29: #{tpu_custom_call.1} parent=1 // pred_fallthru
      _
    %179 = vsyncpa [#allocation3], 1

</llo_original>
